<compile_context>
chip_gen: v5e
topology: v5e:2x2
jax: 0.10.0
libtpu: 0.0.40
codegen_flags: <defaults>
</compile_context>

<pallas_src>
import math

import jax
import jax.numpy as jnp
from jax.experimental import pallas as pl
from jax.experimental.pallas import tpu as pltpu


_BLOCK_BUDGET_BYTES = 2 * 1024 * 1024  # per-array block; 2 bufs x (in+out) ~ 8 MiB VMEM


def _aligned_tile(n, cap, align=1):
    """Block size for a dim of extent n.

    Returns the full dim when it fits under `cap`, otherwise the largest
    multiple of `align` that is <= cap (at least `align`).  Non-divisor
    tiles are fine: the grid uses pl.cdiv and Pallas handles the ragged
    edge block, so the tile is always either the full dim or aligned —
    keeping the (8,128) BlockSpec rule and dense (unmasked) stores.
    """
    n = int(n)
    cap = int(max(1, cap))
    align = int(max(1, align))
    if n <= cap:
        return n
    t = max(align, (cap // align) * align)
    return min(t, n)


def _swap_minor_kernel(x_ref, o_ref):
    # x_ref: (TA, TQ, TB)  ->  o_ref: (TB, TQ, TA)
    # True minor-dim transpose: lanes really move, so the XLU does the work
    # on a bounded, lane-aligned tile (overlapped with the DMA pipeline).
    o_ref[...] = jnp.transpose(x_ref[...], (2, 1, 0))


def _swap_outer_kernel(x_ref, o_ref):
    # x_ref: (TA, TQ, TB, R)  ->  o_ref: (TB, TQ, TA, R)
    # The minor (lane) axis R is untouched: this is sublane re-layout only,
    # near-memcpy when TA/TB are at the sublane packing.
    o_ref[...] = jnp.transpose(x_ref[...], (2, 1, 0, 3))


def transpose_layer(x, dim1, dim2):
    """Pallas equivalent of torch.Tensor.transpose(dim1, dim2)."""
    nd = x.ndim
    if nd == 0:
        return x
    d1 = dim1 % nd
    d2 = dim2 % nd
    if d1 == d2:
        return x
    d1, d2 = min(d1, d2), max(d1, d2)

    shape = x.shape
    P = math.prod(shape[:d1])
    A = shape[d1]
    Q = math.prod(shape[d1 + 1:d2])
    B = shape[d2]
    R = math.prod(shape[d2 + 1:])

    out_nd_shape = (shape[:d1] + (shape[d2],) + shape[d1 + 1:d2]
                    + (shape[d1],) + shape[d2 + 1:])

    # Degenerate swaps are metadata-only relabels: skip the HBM round trip.
    if x.size == 0 or A == 1 or B == 1:
        return jnp.swapaxes(x, d1, d2)

    itemsize = jnp.dtype(x.dtype).itemsize
    sub_align = max(1, 32 // itemsize)  # sublane packing: 8 (f32) / 16 (bf16) / 32 (i8)
    budget_elems = max(1, _BLOCK_BUDGET_BYTES // itemsize)

    if R == 1:
        # dim2 is the innermost axis: genuine minor-dim transpose.
        # TA/TB lane-aligned (128-multiple or full dim), TQ a sublane multiple
        # (or full Q) — both load and store stay dense, XLU work is bounded.
        TA = _aligned_tile(A, 256, 128)
        TB = _aligned_tile(B, 256, 128)
        TQ = _aligned_tile(Q, max(sub_align, budget_elems // (TA * TB)), sub_align)
        block_elems = TA * TQ * TB
        grid = (P, pl.cdiv(Q, TQ), pl.cdiv(B, TB), pl.cdiv(A, TA))

        xr = x.reshape(P, A, Q, B)
        in_spec = pl.BlockSpec((None, TA, TQ, TB),
                               lambda p, q, b, a: (p, a, q, b))
        out_spec = pl.BlockSpec((None, TB, TQ, TA),
                                lambda p, q, b, a: (p, b, q, a))
        kernel = _swap_minor_kernel
        out_struct = jax.ShapeDtypeStruct((P, B, Q, A), x.dtype)
    else:
        # dim2 is not innermost: the contiguous minor axis R rides along
        # unchanged; the swap lives in the index maps, the body is a sublane
        # re-layout of a budgeted tile.
        if R >= 128:
            # Rows are already lane-dense (>= 512 B): keep TA/TB minimal so
            # the body is near-memcpy and spend the budget on TQ; fold any
            # leftover (small Q) back into TA/TB.
            TQ = _aligned_tile(Q, max(1, budget_elems // (sub_align * sub_align * R)), 1)
            rows_left = max(1, budget_elems // (TQ * R))
            side = max(sub_align, math.isqrt(rows_left))
            TA = _aligned_tile(A, side, sub_align)
            TB = _aligned_tile(B, side, sub_align)
        else:
            # Narrow R: balance TA and TB (both sublane multiples) so both the
            # read (TB*R) and write (TA*R) DMA runs are >= ~512 B.
            rows_budget = max(1, budget_elems // R)
            min_rows = -(-512 // (R * itemsize))
            min_rows = -(-min_rows // sub_align) * sub_align
            side = max(min_rows, math.isqrt(rows_budget))
            TA = _aligned_tile(A, side, sub_align)
            TB = _aligned_tile(B, side, sub_align)
            TQ = _aligned_tile(Q, max(1, budget_elems // (TA * TB * R)), 1)
        block_elems = TA * TQ * TB * R
        grid = (P, pl.cdiv(Q, TQ), pl.cdiv(B, TB), pl.cdiv(A, TA))

        xr = x.reshape(P, A, Q, B, R)
        in_spec = pl.BlockSpec((None, TA, TQ, TB, R),
                               lambda p, q, b, a: (p, a, q, b, 0))
        out_spec = pl.BlockSpec((None, TB, TQ, TA, R),
                                lambda p, q, b, a: (p, b, q, a, 0))
        kernel = _swap_outer_kernel
        out_struct = jax.ShapeDtypeStruct((P, B, Q, A, R), x.dtype)
        # TODO(synk): when R < 128 the output lane dim is inherently narrow
        # (R stays minor in both views); folding R with A would reintroduce
        # lane-crossing work, so it is left as-is.

    block_bytes = block_elems * itemsize
    # Double-buffered footprint = 2 x (in + out) blocks; add headroom, raise
    # v5e/v6e scoped defaults explicitly, but stay under v7x's 64 MiB physical.
    vmem_limit = int(min(64 << 20, max(32 << 20, 4 * block_bytes + (8 << 20))))
    params = pltpu.CompilerParams(
        dimension_semantics=("parallel",) * 4,
        vmem_limit_bytes=vmem_limit,
    )

    out = pl.pallas_call(
        kernel,
        out_shape=out_struct,
        grid=grid,
        in_specs=[in_spec],
        out_specs=out_spec,
        compiler_params=params,
    )(xr)
    # TODO(synk): if a profile still shows exposed DMA on the strided (read)
    # side, add pipeline_mode=pl.Buffered(3) to in_spec (re-check v7x budget).

    return out.reshape(out_nd_shape)


class TransposeLayer:
    """Mirror of the PyTorch module (no parameters)."""

    def __init__(self, dim1, dim2):
        self.dim1 = dim1
        self.dim2 = dim2

    def __call__(self, input_batch):
        return transpose_layer(input_batch, self.dim1, self.dim2)


if __name__ == "__main__":
    key = jax.random.PRNGKey(0)
    x = jax.random.normal(key, (2, 4, 16, 16), dtype=jnp.float32)

    # Case 1: TransposeLayer(1, 2)  (non-minor dims -> R > 1, R < 128 path)
    layer = TransposeLayer(1, 2)
    y = jax.block_until_ready(layer(x))
    ref = jnp.swapaxes(x, 1, 2)
    assert y.shape == ref.shape and y.dtype == ref.dtype
    assert bool(jnp.array_equal(y, ref))

    # Case 2: TransposeLayer(2, 3)  (last two dims -> R == 1 path)
    layer2 = TransposeLayer(2, 3)
    y2 = jax.block_until_ready(layer2(x))
    ref2 = jnp.swapaxes(x, 2, 3)
    assert y2.shape == ref2.shape
    assert bool(jnp.array_equal(y2, ref2))

    # Case 3: negative dims, 3-D tensor with a lane-aligned minor dim
    x3 = jax.random.normal(key, (2, 8, 128), dtype=jnp.float32)
    y3 = jax.block_until_ready(TransposeLayer(-1, -2)(x3))
    assert bool(jnp.array_equal(y3, jnp.swapaxes(x3, -1, -2)))

    # Case 4: outer-dim swap with a wide (>=128) riding minor axis (R >= 128 path)
    x4 = jax.random.normal(key, (2, 4, 8, 128), dtype=jnp.float32)
    y4 = jax.block_until_ready(TransposeLayer(0, 1)(x4))
    assert bool(jnp.array_equal(y4, jnp.swapaxes(x4, 0, 1)))

    print("KERNEL_OK")
</pallas_src>

<mosaic_0001>
module attributes {stable_mosaic.version = 11 : i64} {
  func.func @_swap_outer_kernel(%arg0: i32, %arg1: i32, %arg2: i32, %arg3: i32, %arg4: memref<1x4x1x16x16xf32, #tpu.memory_space<vmem>>, %arg5: memref<1x16x1x4x16xf32, #tpu.memory_space<vmem>>) attributes {dimension_semantics = [#tpu.dimension_semantics<parallel>, #tpu.dimension_semantics<parallel>, #tpu.dimension_semantics<parallel>, #tpu.dimension_semantics<parallel>], iteration_bounds = array<i64: 2, 1, 1, 1>, scalar_prefetch = 0 : i64, scratch_operands = 0 : i64, tpu.core_type = #tpu.core_type<tc>, window_params = [{transform_indices = @transform_0, window_bounds = array<i64: 1, 4, 1, 16, 16>}, {transform_indices = @transform_1, window_bounds = array<i64: 1, 16, 1, 4, 16>}]} {
    %c0 = arith.constant 0 : index
    %c0_0 = arith.constant 0 : index
    %c0_1 = arith.constant 0 : index
    %c0_2 = arith.constant 0 : index
    %c0_3 = arith.constant 0 : index
    %0 = vector.load %arg4[%c0, %c0_0, %c0_1, %c0_2, %c0_3] : memref<1x4x1x16x16xf32, #tpu.memory_space<vmem>>, vector<1x4x1x16x16xf32>
    %1 = vector.shape_cast %0 : vector<1x4x1x16x16xf32> to vector<4x1x16x16xf32>
    %2 = tpu.transpose %1, [2, 1, 0, 3] : vector<4x1x16x16xf32> -> vector<16x1x4x16xf32>
    %c0_4 = arith.constant 0 : index
    %c0_5 = arith.constant 0 : index
    %c0_6 = arith.constant 0 : index
    %c0_7 = arith.constant 0 : index
    %c0_8 = arith.constant 0 : index
    %3 = vector.load %arg5[%c0_4, %c0_5, %c0_6, %c0_7, %c0_8] : memref<1x16x1x4x16xf32, #tpu.memory_space<vmem>>, vector<1x16x1x4x16xf32>
    %4 = vector.shape_cast %3 : vector<1x16x1x4x16xf32> to vector<16x1x4x16xf32>
    %5 = vector.shape_cast %2 : vector<16x1x4x16xf32> to vector<1x16x1x4x16xf32>
    tpu.vector_store %arg5[%c0_4, %c0_5, %c0_6, %c0_7, %c0_8], %5 {strides = array<i32>} : memref<1x16x1x4x16xf32, #tpu.memory_space<vmem>>, vector<1x16x1x4x16xf32>,
    return
  }
  func.func @transform_0(%arg0: i32, %arg1: i32, %arg2: i32, %arg3: i32) -> (i32, i32, i32, i32, i32) {
    %c0_i32 = arith.constant 0 : i32
    %c0_i32_0 = arith.constant 0 : i32
    return %arg0, %arg3, %arg1, %arg2, %c0_i32 : i32, i32, i32, i32, i32
  }
  func.func @transform_1(%arg0: i32, %arg1: i32, %arg2: i32, %arg3: i32) -> (i32, i32, i32, i32, i32) {
    %c0_i32 = arith.constant 0 : i32
    %c0_i32_0 = arith.constant 0 : i32
    return %arg0, %arg2, %arg1, %arg3, %c0_i32 : i32, i32, i32, i32, i32
  }
}

</mosaic_0001>

<llo_original>
// kernel: tpu_custom_call.1
$region0: #{tpu_custom_call.1}
  #allocation0 [shape = 'u32[]', space=smem, size = 0x4, offset = 0x4, fixed_abs, tag = 'smem constant byte address 0x4 - core index']
  #allocation1 [shape = 'u32[72,128]{1,0:T(1,128)}', space=vmem, size = 0x9000, scoped, tag = 'internal scratch']
  %s0 = inlined_call_operand.hbm [shape: f32[2,4,1,16,16], index: 0, kind: input, shape index: {}]
  %s1 = inlined_call_operand.hbm [shape: f32[2,16,1,4,16], index: 1, kind: output, shape index: {}]
  %s2 = sld [smem:[#allocation0]]
  $region41: #{tpu_custom_call.1} parent=0
    _
  %s4 = ssub.s32 1, %s2
  %s5 = scalar_select 0, %s4, %s2
  $region1: #{tpu_custom_call.1} parent=0
    #allocation2 [shape = 'u8[65536]{0}', space=vmem, size = 0x10000, scoped, tag = 'input window, operand 0']
    #allocation3 [shape = 's32[2]{0}', space=sflag, size = 0x8, scoped, tag = 'scoped memory for tpu_custom_call.1']
    #allocation4 [shape = 's32[2]{0}', space=sflag, size = 0x8, scoped, tag = 'scoped memory for tpu_custom_call.1']
    #allocation5 [shape = 'u8[65536]{0}', space=vmem, size = 0x10000, scoped, tag = 'output window, operand 0']
    %6 = vsyncpa [#allocation3], 0
    %s7 = scalar_lea.sflag [#allocation3], 1
    %8 = vsyncpa %s7, 0
    %9 = vsyncpa [#allocation4], 0
    %s10 = scalar_lea.sflag [#allocation4], 1
    %11 = vsyncpa %s10, 0
    loop: start=0, step=1, limit=4
    $region2: #{tpu_custom_call.1} parent=1 // loop_pre_header
      _
    $region3: #{tpu_custom_call.1} parent=1 // loop_header
      %s13 = sphi 0, %s17
      %p14 = scmp.ge.s32.totalorder %s13, 4
      %s20 = sphi 0, %s46
      %s21 = sphi 0, %s42
      %s22 = sphi 0, %s38
      %s23 = sphi 0, %s34
      %s24 = sphi 0, %s20
      %s25 = sphi 0, %s21
      %s26 = sphi 0, %s22
      %s27 = sphi 0, %s23
      %s28 = sphi 0, %s24
      %s29 = sphi 0, %s25
      %s30 = sphi 0, %s26
      %s31 = sphi 0, %s27
      %s55 = sphi 0, %s57
      %s58 = sphi 0, %s55
      %s59 = sphi 0, %s58
      %s75 = sphi 0, %s59
      %s87 = sphi 0, %s89
      %s90 = sphi 0, %s87
      %s91 = sphi 0, %s90
      %s107 = sphi 0, %s91
    $region4: #{tpu_custom_call.1} parent=1 // loop_header_branch
      %16 = sbr.rel (%p14) target = $region8
    $region5: #{tpu_custom_call.1} parent=1 // loop_body
      %s18 = ssub.s32 %s13, 1
      %s19 = ssub.s32 %s13, 2
      %s32 = sadd.s32 1, %s23
      %p33 = scmp.ge.s32.totalorder %s32, 1
      %s34 = scalar_select %p33, 0, %s32
      %s35 = sadd.s32 1, %s22
      %s36 = scalar_select %p33, %s35, %s22
      %p37 = scmp.ge.s32.totalorder %s36, 1
      %s38 = scalar_select %p37, 0, %s36
      %s39 = sadd.s32 1, %s21
      %s40 = scalar_select %p37, %s39, %s21
      %p41 = scmp.ge.s32.totalorder %s40, 1
      %s42 = scalar_select %p41, 0, %s40
      %s43 = sadd.s32 1, %s20
      %s44 = scalar_select %p41, %s43, %s20
      %p45 = scmp.ge.s32.totalorder %s44, 2
      %s46 = scalar_select %p45, 0, %s44
      %s47 = ssub.s32 %s20, %s46
      %s48 = ssub.s32 %s23, %s34
      %s49 = sor.u32 %s47, %s48
      %s50 = ssub.s32 %s21, %s42
      %s51 = sor.u32 %s49, %s50
      %s52 = ssub.s32 %s22, %s38
      %s53 = sor.u32 %s51, %s52
      %p54 = scmp.eq.s32.totalorder %s53, 0
      %s56 = sadd.s32 %s55, 1
      %s57 = scalar_select %p54, %s55, %s56
      %p60 = pneg %p54
      %p61 = scmp.eq.s32.totalorder %s13, 1
      %p62 = por %p60, %p61
      %p63 = scmp.ne.s32.totalorder %s55, %s58
      %p64 = scmp.eq.s32.totalorder %s13, 0
      %p65 = por %p63, %p64
      %p66 = scmp.ne.s32.totalorder %s55, %s58
      %p67 = scmp.eq.s32.totalorder %s18, 1
      %p68 = por %p66, %p67
      %p69 = scmp.ne.s32.totalorder %s58, %s59
      %p70 = scmp.eq.s32.totalorder %s18, 0
      %p71 = por %p69, %p70
      %p72 = scmp.ne.s32.totalorder %s58, %s59
      %p73 = scmp.eq.s32.totalorder %s19, 1
      %p74 = por %p72, %p73
      %p76 = scmp.ne.s32.totalorder %s59, %s75
      %p77 = scmp.eq.s32.totalorder %s19, 0
      %p78 = por %p76, %p77
      %s79 = ssub.s32 %s20, %s46
      %s80 = ssub.s32 %s22, %s38
      %s81 = sor.u32 %s79, %s80
      %s82 = ssub.s32 %s21, %s42
      %s83 = sor.u32 %s81, %s82
      %s84 = ssub.s32 %s23, %s34
      %s85 = sor.u32 %s83, %s84
      %p86 = scmp.eq.s32.totalorder %s85, 0
      %s88 = sadd.s32 %s87, 1
      %s89 = scalar_select %p86, %s87, %s88
      %p92 = pneg %p86
      %p93 = scmp.eq.s32.totalorder %s13, 1
      %p94 = por %p92, %p93
      %p95 = scmp.ne.s32.totalorder %s87, %s90
      %p96 = scmp.eq.s32.totalorder %s13, 0
      %p97 = por %p95, %p96
      %p98 = scmp.ne.s32.totalorder %s87, %s90
      %p99 = scmp.eq.s32.totalorder %s18, 1
      %p100 = por %p98, %p99
      %p101 = scmp.ne.s32.totalorder %s90, %s91
      %p102 = scmp.eq.s32.totalorder %s18, 0
      %p103 = por %p101, %p102
      %p104 = scmp.ne.s32.totalorder %s90, %s91
      %p105 = scmp.eq.s32.totalorder %s19, 1
      %p106 = por %p104, %p105
      %p108 = scmp.ne.s32.totalorder %s91, %s107
      %p109 = scmp.eq.s32.totalorder %s19, 0
      %p110 = por %p108, %p109
      %p111 = scmp.le.s32.totalorder 1, %s13
      %p112 = scmp.lt.s32.totalorder %s13, 3
      %p113 = pnand %p111, %p112
      %p114 = pneg %p113
      // Predicated region
      $region9: #{tpu_custom_call.1} parent=5 // pred_check
        _
      $region10: #{tpu_custom_call.1} parent=5 // pred_check_branch
        %116 = sbr.rel (%p113) target = $region12
      $region11: #{tpu_custom_call.1} parent=5 // pred_region
        %s117 = ssub.s32 %s13, 1
      $region12: #{tpu_custom_call.1} parent=5 // pred_fallthru
        _
      %p118 = scmp.lt.s32.totalorder %s13, 2
      // Predicated region
      $region13: #{tpu_custom_call.1} parent=5 // pred_check
        %p119 = pneg %p118
      $region14: #{tpu_custom_call.1} parent=5 // pred_check_branch
        %121 = sbr.rel (%p119) target = $region16
      $region15: #{tpu_custom_call.1} parent=5 // pred_region
        // Predicated region
        $region17: #{tpu_custom_call.1} parent=15 // pred_check
          %p122 = pneg %p65
        $region18: #{tpu_custom_call.1} parent=15 // pred_check_branch
          %124 = sbr.rel (%p122) target = $region20
        $region19: #{tpu_custom_call.1} parent=15 // pred_region
          %s125 = sand.u32 %s55, 1
          %s126 = scalar_lea.sflag [#allocation3], %s125
          %s127 = sand.u32 %s55, 1
          %s128 = smul.addr %s127, 64
          %s129 = scalar_lea.vmem [#allocation2], %s128
          %s130 = smul.u32 4, %s23
          %s131 = smul.u32 2, %s22
          %133 = vsyncadd %s126, 0
          %s134 = smul.addr %s21, 2
          %s135 = sadd.s32 %s131, %s134
          %s136 = smul.addr %s130, 2
          %s137 = sadd.s32 %s135, %s136
          %s138 = smul.addr %s20, 8
          %s139 = sadd.s32 %s137, %s138
          %s140 = smul.addr %s139, 8
          %s141 = scalar_lea.hbm %s0, %s140
          %s142 = sshll.u32 %s141, 4
          %s143 = int_to_ptr.hbm [resolvable:$true] %s142
          %s144 = sshll.u32 %s129, 4
          %s145 = int_to_ptr.vmem [resolvable:$true] %s144
          %150 = dma.hbm_to_vmem [thread:$0]  %s143, 1024, %s145, %s126, 128, 128, 8
        $region20: #{tpu_custom_call.1} parent=15 // pred_fallthru
          _
      $region16: #{tpu_custom_call.1} parent=5 // pred_fallthru
        _
      %p151 = scmp.le.s32.totalorder 1, %s13
      %p152 = scmp.lt.s32.totalorder %s13, 3
      %p153 = pnand %p151, %p152
      %p154 = pneg %p153
      // Predicated region
      $region21: #{tpu_custom_call.1} parent=5 // pred_check
        _
      $region22: #{tpu_custom_call.1} parent=5 // pred_check_branch
        %156 = sbr.rel (%p153) target = $region24
      $region23: #{tpu_custom_call.1} parent=5 // pred_region
        %s157 = ssub.s32 %s13, 1
        %s158 = sand.u32 %s58, 1
        %s159 = scalar_lea.sflag [#allocation3], %s158
        %s160 = sand.u32 %s58, 1
        %s161 = smul.addr %s160, 64
        %s162 = scalar_lea.vmem [#allocation2], %s161
        // Predicated region
        $region25: #{tpu_custom_call.1} parent=23 // pred_check
          %p163 = pneg %p71
        $region26: #{tpu_custom_call.1} parent=23 // pred_check_branch
          %165 = sbr.rel (%p163) target = $region28
        $region27: #{tpu_custom_call.1} parent=23 // pred_region
          %167 = dma.done %s159, 1024
        $region28: #{tpu_custom_call.1} parent=23 // pred_fallthru
          _
        %s168 = sand.u32 %s58, 1
        %s169 = scalar_lea.sflag [#allocation3], %s168
        %s170 = sand.u32 %s58, 1
        %s171 = smul.addr %s170, 64
        %s172 = scalar_lea.vmem [#allocation2], %s171
        %p173 = pneg %p71
        %p174 = pneg %p68
        %p175 = pneg %p103
        %p176 = pneg %p100
        %s177 = sand.u32 %s90, 1
        %s178 = scalar_lea.sflag [#allocation4], %s177
        %s179 = sand.u32 %s90, 1
        %s180 = smul.addr %s179, 64
        %s181 = scalar_lea.vmem [#allocation5], %s180
        %s182 = smul.u32 4, %s27
        %s183 = smul.u32 2, %s26
        %s184 = smul.u32 16, %s26
        %v185 = vld [vmem:[%s162] sm:$0xff]
        %v186 = vld [vmem:[%s162 + $0x8] sm:$0xff]
        %v187 = vld [vmem:[%s162 + $0x10] sm:$0xff]
        %v188 = vld [vmem:[%s162 + $0x18] sm:$0xff]
        %v189 = vld [vmem:[%s162 + $0x20] sm:$0xff]
        %v190 = vld [vmem:[%s162 + $0x28] sm:$0xff]
        %v191 = vld [vmem:[%s162 + $0x30] sm:$0xff]
        %v192 = vld [vmem:[%s162 + $0x38] sm:$0xff]
        %v193 = vrot.slane %v189, 4
        %vm194 = vcmask 1047556
        %v195 = vsel %vm194, %v193, %v185
        %v196 = vrot.slane %v185, 4
        %v197 = vsel %vm194, %v189, %v196
        %v199 = vunpack.c.l.s4 1983009808
        %v200 = vunpack.c.0.s8 %v199
        %v201 = vperm.slane %v195, %v200
        %v203 = vunpack.c.l.s4 1983009808
        %v204 = vunpack.c.0.s8 %v203
        %v205 = vperm.slane %v197, %v204
        %v206 = vrot.slane %v191, 4
        %v207 = vsel %vm194, %v206, %v187
        %v208 = vrot.slane %v187, 4
        %v209 = vsel %vm194, %v191, %v208
        %v211 = vunpack.c.l.s4 1983009808
        %v212 = vunpack.c.0.s8 %v211
        %v213 = vperm.slane %v207, %v212
        %v215 = vunpack.c.l.s4 1983009808
        %v216 = vunpack.c.0.s8 %v215
        %v217 = vperm.slane %v209, %v216
        %v218 = vrot.slane %v213, 4
        %v219 = vsel %vm194, %v218, %v201
        %v220 = vrot.slane %v201, 4
        %v221 = vsel %vm194, %v213, %v220
        %v223 = vunpack.c.l.s4 1934713408
        %v224 = vunpack.c.0.s8 %v223
        %v225 = vperm.slane %v219, %v224
        %v227 = vunpack.c.l.s4 1934713408
        %v228 = vunpack.c.0.s8 %v227
        %v229 = vperm.slane %v221, %v228
        %v230 = vrot.slane %v217, 4
        %v231 = vsel %vm194, %v230, %v205
        %v232 = vrot.slane %v205, 4
        %v233 = vsel %vm194, %v217, %v232
        %v235 = vunpack.c.l.s4 1934713408
        %v236 = vunpack.c.0.s8 %v235
        %v237 = vperm.slane %v231, %v236
        %v239 = vunpack.c.l.s4 1934713408
        %v240 = vunpack.c.0.s8 %v239
        %v241 = vperm.slane %v233, %v240
        %v242 = vrot.slane %v225, 4
        %v243 = vsel %vm194, 0.0, %v242
        %v244 = vrot.slane %v229, 4
        %v245 = vsel %vm194, 0.0, %v244
        %v246 = vrot.slane %v237, 4
        %v247 = vsel %vm194, 0.0, %v246
        %v248 = vrot.slane %v241, 4
        %v249 = vsel %vm194, 0.0, %v248
        %v250 = vrot.slane %v190, 4
        %v251 = vsel %vm194, %v250, %v186
        %v252 = vrot.slane %v186, 4
        %v253 = vsel %vm194, %v190, %v252
        %v255 = vunpack.c.l.s4 1983009808
        %v256 = vunpack.c.0.s8 %v255
        %v257 = vperm.slane %v251, %v256
        %v259 = vunpack.c.l.s4 1983009808
        %v260 = vunpack.c.0.s8 %v259
        %v261 = vperm.slane %v253, %v260
        %v262 = vrot.slane %v192, 4
        %v263 = vsel %vm194, %v262, %v188
        %v264 = vrot.slane %v188, 4
        %v265 = vsel %vm194, %v192, %v264
        %v267 = vunpack.c.l.s4 1983009808
        %v268 = vunpack.c.0.s8 %v267
        %v269 = vperm.slane %v263, %v268
        %v271 = vunpack.c.l.s4 1983009808
        %v272 = vunpack.c.0.s8 %v271
        %v273 = vperm.slane %v265, %v272
        %v274 = vrot.slane %v269, 4
        %v275 = vsel %vm194, %v274, %v257
        %v276 = vrot.slane %v257, 4
        %v277 = vsel %vm194, %v269, %v276
        %v279 = vunpack.c.l.s4 1934713408
        %v280 = vunpack.c.0.s8 %v279
        %v281 = vperm.slane %v275, %v280
        %v283 = vunpack.c.l.s4 1934713408
        %v284 = vunpack.c.0.s8 %v283
        %v285 = vperm.slane %v277, %v284
        %v286 = vrot.slane %v273, 4
        %v287 = vsel %vm194, %v286, %v261
        %v288 = vrot.slane %v261, 4
        %v289 = vsel %vm194, %v273, %v288
        %v291 = vunpack.c.l.s4 1934713408
        %v292 = vunpack.c.0.s8 %v291
        %v293 = vperm.slane %v287, %v292
        %v295 = vunpack.c.l.s4 1934713408
        %v296 = vunpack.c.0.s8 %v295
        %v297 = vperm.slane %v289, %v296
        %v298 = vrot.slane %v281, 4
        %v299 = vsel %vm194, 0.0, %v298
        %v300 = vrot.slane %v285, 4
        %v301 = vsel %vm194, 0.0, %v300
        %v302 = vrot.slane %v293, 4
        %v303 = vsel %vm194, 0.0, %v302
        %v304 = vrot.slane %v297, 4
        %v305 = vsel %vm194, 0.0, %v304
        %vm306 = vcmask 125952
        %307 = vst.msk [vmem:[%s181] sm:$0xf] %vm306, %v225
        %308 = vst.msk [vmem:[%s181 + $0x4] sm:$0xf] %vm306, %v243
        %309 = vst.msk [vmem:[%s181 + $0x8] sm:$0xf] %vm306, %v229
        %310 = vst.msk [vmem:[%s181 + $0xc] sm:$0xf] %vm306, %v245
        %311 = vst.msk [vmem:[%s181 + $0x10] sm:$0xf] %vm306, %v237
        %312 = vst.msk [vmem:[%s181 + $0x14] sm:$0xf] %vm306, %v247
        %313 = vst.msk [vmem:[%s181 + $0x18] sm:$0xf] %vm306, %v241
        %314 = vst.msk [vmem:[%s181 + $0x1c] sm:$0xf] %vm306, %v249
        %315 = vst.msk [vmem:[%s181 + $0x20] sm:$0xf] %vm306, %v281
        %316 = vst.msk [vmem:[%s181 + $0x24] sm:$0xf] %vm306, %v299
        %317 = vst.msk [vmem:[%s181 + $0x28] sm:$0xf] %vm306, %v285
        %318 = vst.msk [vmem:[%s181 + $0x2c] sm:$0xf] %vm306, %v301
        %319 = vst.msk [vmem:[%s181 + $0x30] sm:$0xf] %vm306, %v293
        %320 = vst.msk [vmem:[%s181 + $0x34] sm:$0xf] %vm306, %v303
        %321 = vst.msk [vmem:[%s181 + $0x38] sm:$0xf] %vm306, %v297
        %322 = vst.msk [vmem:[%s181 + $0x3c] sm:$0xf] %vm306, %v305
        %s323 = sand.u32 %s90, 1
        %s324 = scalar_lea.sflag [#allocation4], %s323
        %s325 = sand.u32 %s90, 1
        %s326 = smul.addr %s325, 64
        %s327 = scalar_lea.vmem [#allocation5], %s326
        // Predicated region
        $region29: #{tpu_custom_call.1} parent=23 // pred_check
          %p328 = pneg %p100
        $region30: #{tpu_custom_call.1} parent=23 // pred_check_branch
          %330 = sbr.rel (%p328) target = $region32
        $region31: #{tpu_custom_call.1} parent=23 // pred_region
          %s331 = smul.u32 16, %s26
          %333 = vsyncadd %s324, 0
          %s334 = sadd.s32 %s27, %s25
          %s335 = sadd.s32 %s334, %s331
          %s336 = smul.addr %s24, 16
          %s337 = sadd.s32 %s335, %s336
          %s338 = smul.addr %s337, 4
          %s339 = scalar_lea.hbm %s1, %s338
          %s340 = sshll.u32 %s327, 4
          %s341 = int_to_ptr.vmem [resolvable:$true] %s340
          %s342 = sshll.u32 %s339, 4
          %s343 = int_to_ptr.hbm [resolvable:$true] %s342
          %348 = dma.vmem_to_hbm [thread:$0]  %s341, 1024, %s343, %s324, 64, 64, 4
        $region32: #{tpu_custom_call.1} parent=23 // pred_fallthru
          _
      $region24: #{tpu_custom_call.1} parent=5 // pred_fallthru
        _
      %p349 = scmp.le.s32.totalorder 2, %s13
      // Predicated region
      $region33: #{tpu_custom_call.1} parent=5 // pred_check
        %p350 = pneg %p349
      $region34: #{tpu_custom_call.1} parent=5 // pred_check_branch
        %352 = sbr.rel (%p350) target = $region36
      $region35: #{tpu_custom_call.1} parent=5 // pred_region
        %s353 = ssub.s32 %s13, 2
        // Predicated region
        $region37: #{tpu_custom_call.1} parent=35 // pred_check
          %p354 = pneg %p106
        $region38: #{tpu_custom_call.1} parent=35 // pred_check_branch
          %356 = sbr.rel (%p354) target = $region40
        $region39: #{tpu_custom_call.1} parent=35 // pred_region
          %s357 = sand.u32 %s91, 1
          %s358 = scalar_lea.sflag [#allocation4], %s357
          %s359 = sand.u32 %s91, 1
          %s360 = smul.addr %s359, 64
          %s361 = scalar_lea.vmem [#allocation5], %s360
          %363 = dma.done %s358, 1024
        $region40: #{tpu_custom_call.1} parent=35 // pred_fallthru
          _
      $region36: #{tpu_custom_call.1} parent=5 // pred_fallthru
        _
    $region6: #{tpu_custom_call.1} parent=1 // loop_footer
      %s17 = sadd.s32 1, %s13
    $region7: #{tpu_custom_call.1} parent=1 // loop_footer_branch
      %12 = sbr.rel target = $region3
    $region8: #{tpu_custom_call.1} parent=1 // loop_exit
      _
    %364 = vsyncpa [#allocation3], 1
    %s365 = scalar_lea.sflag [#allocation3], 1
    %366 = vsyncpa %s365, 1
    %367 = vsyncpa [#allocation4], 1
    %s368 = scalar_lea.sflag [#allocation4], 1
    %369 = vsyncpa %s368, 1

</llo_original>
